<compile_context>
chip_gen: v6e
topology: v6e:2x2x1
jax: 0.10.0
libtpu: 0.0.40
codegen_flags: <defaults>
</compile_context>

<pallas_src>
import jax
import jax.numpy as jnp
from jax.experimental import pallas as pl
from jax.experimental.pallas import tpu as pltpu


def gima_kernel(fusion_ref, u_ref, w_ref, b_ref, out_ref):
    # fusion_ref: (TB, S, F) native dtype   u_ref: (1, F) native dtype
    # w_ref:      (F, Cp)    f32            b_ref: (1, Cp) f32
    f = fusion_ref[...]                                        # (TB, S, F)
    tb, s, fd = f.shape

    # scores: F-contraction on the MXU; both operands in the fusion dtype,
    # f32 accumulation via preferred_element_type (no slab promotion).
    u_b = jnp.broadcast_to(u_ref[...].reshape(1, 1, fd), (tb, 1, fd))
    scores = jnp.einsum("bqd,bkd->bqk", u_b, f,
                        preferred_element_type=jnp.float32)    # (TB, 1, S)

    # Numerically stable softmax statistics over the sequence axis.
    m = jnp.max(scores, axis=-1, keepdims=True)                # (TB, 1, 1)
    e = jnp.exp(scores - m)                                    # (TB, 1, S)
    denom = jnp.sum(e, axis=-1, keepdims=True)                 # (TB, 1, 1)

    # Fold the residual (mean over S) into the same MXU pass: weight row 0 is
    # the un-normalized softmax, row 1 is all-ones (=> plain sum over S).
    wts = jnp.concatenate([e, jnp.ones_like(e)], axis=1).astype(f.dtype)  # (TB,2,S)
    agg2 = jnp.einsum("bqk,bkd->bqd", wts, f,
                      preferred_element_type=jnp.float32)      # (TB, 2, F)
    agg = agg2[:, 0, :]        # un-normalized attention aggregation
    res_sum = agg2[:, 1, :]    # sum_s fusion

    # gated = (agg / denom) * (res_sum / S): one fused scale; EUP reciprocal.
    inv = pl.reciprocal(denom[:, 0, :] * jnp.float32(s), approx=True)     # (TB, 1)
    gated = agg * res_sum * inv                                # (TB, F) f32

    # Final projection with lane-dense Cp (multiple of 128).
    logits = jnp.dot(gated, w_ref[...], preferred_element_type=jnp.float32)
    out_ref[...] = (logits + b_ref[...]).astype(out_ref.dtype)


def _vmem_capacity_bytes():
    try:
        return int(pltpu.get_tpu_info().vmem_capacity_bytes)
    except Exception:
        return 64 * 1024 * 1024          # conservative fallback (v7x-sized)


def _pick_tile_and_limit(B, S, F, Cp, in_itemsize, out_itemsize):
    """Batch tile + scoped VMEM limit, generation aware.

    64 MiB-VMEM parts (v7x): smaller budget and the tile is capped so the grid
    has >= 2 steps, letting the "parallel" axis shard across both TensorCores.
    128 MiB-VMEM parts (v5e/v6e): much larger tiles to amortize the ~0.35us
    per-grid-step overhead on the purely HBM-bound fusion stream.
    """
    cap = _vmem_capacity_bytes()
    if cap <= 80 * 1024 * 1024:
        tile_budget, vmem_limit, min_steps = 24 << 20, 48 << 20, 2
    else:
        tile_budget, vmem_limit, min_steps = 56 << 20, 96 << 20, 1

    # Per-batch-row footprint: double-buffered fusion + output streams plus
    # f32 in-kernel temporaries (scores/e/weights, agg2, gated, logits).
    row = (2 * (S * F * in_itemsize + Cp * out_itemsize)
           + (4 * S + 4 * F + 2 * Cp) * 4)
    # Resident broadcast operands (double-buffered W, bias, U).
    fixed = 2 * (F * Cp * 4 + Cp * 4 + F * in_itemsize)

    sub = 16 if out_itemsize < 4 else 8          # bf16 sublane packing is 16
    tb = max((tile_budget - fixed) // max(row, 1), sub)
    tb = min(tb, 1024)
    if min_steps > 1:
        tb = min(tb, max(pl.cdiv(B, min_steps), sub))   # >= 2 steps on v7x
    if tb >= B:
        tb = B                                   # one step; full-batch block
    else:
        tb = max(sub, (tb // sub) * sub)         # sublane-aligned output tile
        if tb >= B:
            tb = B

    need = fixed + row * tb + (2 << 20)
    vmem_limit = min(max(vmem_limit, need), cap - (4 << 20))
    return tb, int(vmem_limit)


@jax.jit
def global_inter_modal_attention(fusion, U, fc_weight, fc_bias):
    """fusion: (B, S, F), U: (F,), fc_weight: (C, F), fc_bias: (C,) -> (B, C)."""
    B, S, F = fusion.shape
    C = fc_weight.shape[0]
    Cp = pl.cdiv(C, 128) * 128                   # lane-dense output width

    # Parameter layout / zero-padding fuses under jit (no per-call HBM churn).
    u2 = U.astype(fusion.dtype).reshape(1, F)    # keep U in the fusion dtype
    w_pad = jnp.zeros((F, Cp), jnp.float32).at[:, :C].set(
        fc_weight.T.astype(jnp.float32))
    b_pad = jnp.zeros((1, Cp), jnp.float32).at[:, :C].set(
        fc_bias.astype(jnp.float32).reshape(1, C))

    TB, vmem_limit = _pick_tile_and_limit(
        B, S, F, Cp, fusion.dtype.itemsize, fusion.dtype.itemsize)

    out = pl.pallas_call(
        gima_kernel,
        out_shape=jax.ShapeDtypeStruct((B, Cp), fusion.dtype),
        grid_spec=pltpu.PrefetchScalarGridSpec(
            num_scalar_prefetch=0,
            grid=(pl.cdiv(B, TB),),               # no batch padding in HBM
            in_specs=[
                pl.BlockSpec((TB, S, F), lambda i: (i, 0, 0)),   # streamed tile
                pl.BlockSpec((1, F), lambda i: (0, 0)),          # broadcast U
                pl.BlockSpec((F, Cp), lambda i: (0, 0)),         # broadcast W
                pl.BlockSpec((1, Cp), lambda i: (0, 0)),         # broadcast b
            ],
            out_specs=pl.BlockSpec((TB, Cp), lambda i: (i, 0)),
        ),
        compiler_params=pltpu.CompilerParams(
            dimension_semantics=("parallel",),    # megacore sharding on v7x
            vmem_limit_bytes=vmem_limit,
        ),
    )(fusion, u2, w_pad, b_pad)
    return out[:, :C]


def _reference(fusion, U, fc_weight, fc_bias):
    scores = jnp.einsum("bsf,f->bs", fusion, U)
    attn = jax.nn.softmax(scores, axis=1)[..., None]
    aggregated = jnp.sum(fusion * attn, axis=1)
    residual = jnp.mean(fusion, axis=1)
    gated = aggregated * residual
    return gated @ fc_weight.T + fc_bias


if __name__ == "__main__":
    # Shapes consistent with the module's forward:
    # batch=2, seq_len=8, projection_dim=16 -> fusion_dim=32, num_classes=4
    B, S, proj_dim, num_classes = 2, 8, 16, 4
    fusion_dim = 2 * proj_dim

    key = jax.random.PRNGKey(0)
    k_fusion, k_u, k_w, k_b = jax.random.split(key, 4)

    fusion = jax.random.normal(k_fusion, (B, S, fusion_dim), dtype=jnp.float32)
    # Parameters initialized deterministically in-script (synthetic, no checkpoint).
    U = jax.random.normal(k_u, (fusion_dim,), dtype=jnp.float32)
    fc_weight = jax.random.normal(k_w, (num_classes, fusion_dim), jnp.float32) * 0.1
    fc_bias = jax.random.normal(k_b, (num_classes,), jnp.float32) * 0.1

    logits = global_inter_modal_attention(fusion, U, fc_weight, fc_bias)
    logits = jax.block_until_ready(logits)

    ref = _reference(fusion, U, fc_weight, fc_bias)
    assert logits.shape == (B, num_classes)
    # MXU f32 contraction order + EUP-approx reciprocal differ slightly from
    # the pure-XLA reference; tolerance covers both.
    assert jnp.allclose(logits, ref, rtol=2e-3, atol=2e-3), "mismatch vs reference"

    print("KERNEL_OK")
</pallas_src>

<mosaic_0001>
module attributes {stable_mosaic.version = 11 : i64} {
  func.func @gima_kernel(%arg0: i32, %arg1: memref<2x8x32xf32, #tpu.memory_space<vmem>>, %arg2: memref<1x32xf32, #tpu.memory_space<vmem>>, %arg3: memref<32x128xf32, #tpu.memory_space<vmem>>, %arg4: memref<1x128xf32, #tpu.memory_space<vmem>>, %arg5: memref<2x128xf32, #tpu.memory_space<vmem>>) attributes {dimension_semantics = [#tpu.dimension_semantics<parallel>], iteration_bounds = array<i64: 1>, scalar_prefetch = 0 : i64, scratch_operands = 0 : i64, tpu.core_type = #tpu.core_type<tc>, window_params = [{transform_indices = @transform_0, window_bounds = array<i64: 2, 8, 32>}, {pipeline_mode = #tpu.pipeline_mode<synchronous>, transform_indices = @transform_1, window_bounds = array<i64: 1, 32>}, {pipeline_mode = #tpu.pipeline_mode<synchronous>, transform_indices = @transform_2, window_bounds = array<i64: 32, 128>}, {pipeline_mode = #tpu.pipeline_mode<synchronous>, transform_indices = @transform_3, window_bounds = array<i64: 1, 128>}, {transform_indices = @transform_4, window_bounds = array<i64: 2, 128>}]} {
    %c0 = arith.constant 0 : index
    %c0_0 = arith.constant 0 : index
    %c0_1 = arith.constant 0 : index
    %0 = vector.load %arg1[%c0, %c0_0, %c0_1] : memref<2x8x32xf32, #tpu.memory_space<vmem>>, vector<2x8x32xf32>
    %c0_2 = arith.constant 0 : index
    %c0_3 = arith.constant 0 : index
    %1 = vector.load %arg2[%c0_2, %c0_3] : memref<1x32xf32, #tpu.memory_space<vmem>>, vector<1x32xf32>
    %2 = vector.shape_cast %1 : vector<1x32xf32> to vector<1x1x32xf32>
    %3 = vector.shape_cast %2 : vector<1x1x32xf32> to vector<1x1x32xf32>
    %4 = vector.broadcast %3 : vector<1x1x32xf32> to vector<2x1x32xf32>
    "tpu.trace_start"() <{level = 10 : i32, message = "bqd,bkd->bqk"}> : () -> ()
    %cst = arith.constant dense<0.000000e+00> : vector<2x1x8xf32>
    %5 = tpu.matmul %4, %0, %cst {dimension_numbers = #tpu.dot_dimension_numbers<[2], [2], [1], [1], [0, 0, 0, 1, 1, 1], [0], [0]>} : vector<2x1x32xf32>, vector<2x8x32xf32>, vector<2x1x8xf32> -> vector<2x1x8xf32>
    "tpu.trace_stop"() : () -> ()
    %cst_4 = arith.constant dense<0xFF800000> : vector<2x1xf32>
    %6 = vector.multi_reduction <maximumf>, %5, %cst_4 [2] : vector<2x1x8xf32> to vector<2x1xf32>
    %7 = vector.shape_cast %6 : vector<2x1xf32> to vector<2x1x1xf32>
    %8 = vector.broadcast %7 : vector<2x1x1xf32> to vector<2x1x8xf32>
    %9 = arith.subf %5, %8 : vector<2x1x8xf32>
    %10 = math.exp %9 : vector<2x1x8xf32>
    %cst_5 = arith.constant dense<0.000000e+00> : vector<2x1xf32>
    %11 = vector.multi_reduction <add>, %10, %cst_5 [2] : vector<2x1x8xf32> to vector<2x1xf32>
    %12 = vector.shape_cast %11 : vector<2x1xf32> to vector<2x1x1xf32>
    %cst_6 = arith.constant 1.000000e+00 : f32
    %13 = vector.broadcast %cst_6 : f32 to vector<2x1x8xf32>
    %14 = tpu.concatenate %10, %13 in 1 : vector<2x1x8xf32>, vector<2x1x8xf32> -> vector<2x2x8xf32>
    "tpu.trace_start"() <{level = 10 : i32, message = "bqk,bkd->bqd"}> : () -> ()
    %cst_7 = arith.constant dense<0.000000e+00> : vector<2x2x32xf32>
    %15 = tpu.matmul %14, %0, %cst_7 {dimension_numbers = #tpu.dot_dimension_numbers<[2], [1], [1], [2], [0, 0, 0, 1, 1, 2], [0], [0]>} : vector<2x2x8xf32>, vector<2x8x32xf32>, vector<2x2x32xf32> -> vector<2x2x32xf32>
    "tpu.trace_stop"() : () -> ()
    %16 = vector.extract_strided_slice %15 {offsets = [0, 0, 0], sizes = [2, 1, 32], strides = [1, 1, 1]} : vector<2x2x32xf32> to vector<2x1x32xf32>
    %17 = vector.shape_cast %16 : vector<2x1x32xf32> to vector<2x32xf32>
    %18 = vector.extract_strided_slice %15 {offsets = [0, 1, 0], sizes = [2, 1, 32], strides = [1, 1, 1]} : vector<2x2x32xf32> to vector<2x1x32xf32>
    %19 = vector.shape_cast %18 : vector<2x1x32xf32> to vector<2x32xf32>
    %20 = vector.shape_cast %12 : vector<2x1x1xf32> to vector<2x1xf32>
    %cst_8 = arith.constant 8.000000e+00 : f32
    %21 = vector.broadcast %cst_8 : f32 to vector<2x1xf32>
    %22 = arith.mulf %20, %21 : vector<2x1xf32>
    %23 = tpu.reciprocal %22 {approx = true} : vector<2x1xf32> -> vector<2x1xf32>
    %24 = arith.mulf %17, %19 : vector<2x32xf32>
    %25 = vector.broadcast %23 : vector<2x1xf32> to vector<2x32xf32>
    %26 = arith.mulf %24, %25 : vector<2x32xf32>
    %c0_9 = arith.constant 0 : index
    %c0_10 = arith.constant 0 : index
    %27 = vector.load %arg3[%c0_9, %c0_10] : memref<32x128xf32, #tpu.memory_space<vmem>>, vector<32x128xf32>
    %cst_11 = arith.constant dense<0.000000e+00> : vector<2x128xf32>
    %28 = tpu.matmul %26, %27, %cst_11 {dimension_numbers = #tpu.dot_dimension_numbers<[1], [0], [0], [1], [0, 0, 1, 1], [], []>} : vector<2x32xf32>, vector<32x128xf32>, vector<2x128xf32> -> vector<2x128xf32>
    %c0_12 = arith.constant 0 : index
    %c0_13 = arith.constant 0 : index
    %29 = vector.load %arg4[%c0_12, %c0_13] : memref<1x128xf32, #tpu.memory_space<vmem>>, vector<1x128xf32>
    %30 = vector.broadcast %29 : vector<1x128xf32> to vector<2x128xf32>
    %31 = arith.addf %28, %30 : vector<2x128xf32>
    %c0_14 = arith.constant 0 : index
    %c0_15 = arith.constant 0 : index
    %32 = vector.load %arg5[%c0_14, %c0_15] : memref<2x128xf32, #tpu.memory_space<vmem>>, vector<2x128xf32>
    tpu.vector_store %arg5[%c0_14, %c0_15], %31 {strides = array<i32>} : memref<2x128xf32, #tpu.memory_space<vmem>>, vector<2x128xf32>,
    return
  }
  func.func @transform_0(%arg0: i32) -> (i32, i32, i32) {
    %c0_i32 = arith.constant 0 : i32
    %c0_i32_0 = arith.constant 0 : i32
    %c0_i32_1 = arith.constant 0 : i32
    return %arg0, %c0_i32, %c0_i32_0 : i32, i32, i32
  }
  func.func @transform_1(%arg0: i32) -> (i32, i32) {
    %c0_i32 = arith.constant 0 : i32
    %c0_i32_0 = arith.constant 0 : i32
    %c0_i32_1 = arith.constant 0 : i32
    return %c0_i32, %c0_i32_0 : i32, i32
  }
  func.func @transform_2(%arg0: i32) -> (i32, i32) {
    %c0_i32 = arith.constant 0 : i32
    %c0_i32_0 = arith.constant 0 : i32
    %c0_i32_1 = arith.constant 0 : i32
    return %c0_i32, %c0_i32_0 : i32, i32
  }
  func.func @transform_3(%arg0: i32) -> (i32, i32) {
    %c0_i32 = arith.constant 0 : i32
    %c0_i32_0 = arith.constant 0 : i32
    %c0_i32_1 = arith.constant 0 : i32
    return %c0_i32, %c0_i32_0 : i32, i32
  }
  func.func @transform_4(%arg0: i32) -> (i32, i32) {
    %c0_i32 = arith.constant 0 : i32
    %c0_i32_0 = arith.constant 0 : i32
    return %arg0, %c0_i32 : i32, i32
  }
}

</mosaic_0001>

<llo_original>
// kernel: global_inter_modal_attention.1
$region0: #{global_inter_modal_attention.1}
  #allocation0 [shape = 'u32[]', space=smem, size = 0x4, offset = 0x4, fixed_abs, tag = 'smem constant byte address 0x4 - core index']
  #allocation1 [shape = 'u32[144,128]{1,0:T(1,128)}', space=vmem, size = 0x12000, scoped, tag = 'internal scratch']
  %s0 = inlined_call_operand.vmem [shape: f32[2,8,32], index: 0, kind: input, shape index: {}]
  %s1 = inlined_call_operand.vmem [shape: f32[1,32], index: 1, kind: input, shape index: {}]
  %s2 = inlined_call_operand.vmem [shape: f32[32,128], index: 2, kind: input, shape index: {}]
  %s3 = inlined_call_operand.vmem [shape: f32[1,128], index: 3, kind: input, shape index: {}]
  %s4 = inlined_call_operand.hbm [shape: f32[2,128], index: 4, kind: output, shape index: {}]
  %s5 = sld [smem:[#allocation0]]
  $region26: #{global_inter_modal_attention.1} parent=0
    _
  %s7 = ssub.s32 1, %s5
  %s8 = scalar_select 0, %s7, %s5
  $region1: #{global_inter_modal_attention.1} parent=0
    #allocation2 [shape = 'u8[1024]{0}', space=vmem, size = 0x400, scoped, tag = 'output window, operand 0, single buffered']
    #allocation3 [shape = 's32[1]{0}', space=sflag, size = 0x4, scoped, tag = 'scoped memory for global_inter_modal_attention.1']
    %9 = vsyncpa [#allocation3], 0
    // Predicated region
    $region2: #{global_inter_modal_attention.1} parent=1 // pred_check
      _
    $region3: #{global_inter_modal_attention.1} parent=1 // pred_check_branch
      %11 = sbr.rel (0) target = $region5
    $region4: #{global_inter_modal_attention.1} parent=1 // pred_region
      _
    $region5: #{global_inter_modal_attention.1} parent=1 // pred_fallthru
      _
    // Predicated region
    $region6: #{global_inter_modal_attention.1} parent=1 // pred_check
      _
    $region7: #{global_inter_modal_attention.1} parent=1 // pred_check_branch
      %13 = sbr.rel (0) target = $region9
    $region8: #{global_inter_modal_attention.1} parent=1 // pred_region
      _
    $region9: #{global_inter_modal_attention.1} parent=1 // pred_fallthru
      _
    // Predicated region
    $region10: #{global_inter_modal_attention.1} parent=1 // pred_check
      _
    $region11: #{global_inter_modal_attention.1} parent=1 // pred_check_branch
      %15 = sbr.rel (0) target = $region13
    $region12: #{global_inter_modal_attention.1} parent=1 // pred_region
      _
    $region13: #{global_inter_modal_attention.1} parent=1 // pred_fallthru
      _
    // Predicated region
    $region14: #{global_inter_modal_attention.1} parent=1 // pred_check
      _
    $region15: #{global_inter_modal_attention.1} parent=1 // pred_check_branch
      %17 = sbr.rel (0) target = $region17
    $region16: #{global_inter_modal_attention.1} parent=1 // pred_region
      _
    $region17: #{global_inter_modal_attention.1} parent=1 // pred_fallthru
      _
    %v18 = vld [vmem:[%s0] sm:$0xff]
    %v19 = vld [vmem:[%s0 + $0x8] sm:$0xff]
    %v20 = vld [vmem:[%s1] sm:$0x1]
    %vm21 = vcmask 261120
    %v23 = vsel %vm21, %v20, 0
    %v26 = vsel %vm21, %v18, 0
    %28 = vmatprep.subr.mxu0 0.0
    %29 = vmatpush1.xpose.msra.mxu0 0.0
    %30 = vmatprep.subr.mxu0 0.0
    %31 = vmatpush1.xpose.msra.mxu0 0.0
    %32 = vmatprep.subr.mxu0 0.0
    %33 = vmatpush1.xpose.msra.mxu0 0.0
    %34 = vmatprep.subr.mxu0 0.0
    %35 = vmatpush1.xpose.msra.mxu0 0.0
    %36 = vmatprep.subr.mxu0 0.0
    %37 = vmatpush1.xpose.msra.mxu0 0.0
    %38 = vmatprep.subr.mxu0 0.0
    %39 = vmatpush1.xpose.msra.mxu0 0.0
    %40 = vmatprep.subr.mxu0 0.0
    %41 = vmatpush1.xpose.msra.mxu0 0.0
    %42 = vmatprep.subr.mxu0 0.0
    %43 = vmatpush1.xpose.msra.mxu0 0.0
    %44 = vmatprep.subr.mxu0 0.0
    %45 = vmatpush1.xpose.msra.mxu0 0.0
    %46 = vmatprep.subr.mxu0 0.0
    %47 = vmatpush1.xpose.msra.mxu0 0.0
    %48 = vmatprep.subr.mxu0 0.0
    %49 = vmatpush1.xpose.msra.mxu0 0.0
    %50 = vmatprep.subr.mxu0 0.0
    %51 = vmatpush1.xpose.msra.mxu0 0.0
    %52 = vmatprep.subr.mxu0 0.0
    %53 = vmatpush1.xpose.msra.mxu0 0.0
    %54 = vmatprep.subr.mxu0 0.0
    %55 = vmatpush1.xpose.msra.mxu0 0.0
    %56 = vmatprep.subr.mxu0 0.0
    %57 = vmatpush1.xpose.msra.mxu0 0.0
    %58 = vmatprep.subr.mxu0 0.0
    %59 = vmatpush1.xpose.msra.mxu0 %v26
    %60 = vmatprep.subr.mxu0 0.0
    %61 = vmatpush2.xpose.msra.mxu0 0.0
    %62 = vmatprep.subr.mxu0 0.0
    %63 = vmatpush2.xpose.msra.mxu0 0.0
    %64 = vmatprep.subr.mxu0 0.0
    %65 = vmatpush2.xpose.msra.mxu0 0.0
    %66 = vmatprep.subr.mxu0 0.0
    %67 = vmatpush2.xpose.msra.mxu0 0.0
    %68 = vmatprep.subr.mxu0 0.0
    %69 = vmatpush2.xpose.msra.mxu0 0.0
    %70 = vmatprep.subr.mxu0 0.0
    %71 = vmatpush2.xpose.msra.mxu0 0.0
    %72 = vmatprep.subr.mxu0 0.0
    %73 = vmatpush2.xpose.msra.mxu0 0.0
    %74 = vmatprep.subr.mxu0 0.0
    %75 = vmatpush2.xpose.msra.mxu0 0.0
    %76 = vmatprep.subr.mxu0 0.0
    %77 = vmatpush2.xpose.msra.mxu0 0.0
    %78 = vmatprep.subr.mxu0 0.0
    %79 = vmatpush2.xpose.msra.mxu0 0.0
    %80 = vmatprep.subr.mxu0 0.0
    %81 = vmatpush2.xpose.msra.mxu0 0.0
    %82 = vmatprep.subr.mxu0 0.0
    %83 = vmatpush2.xpose.msra.mxu0 0.0
    %84 = vmatprep.subr.mxu0 0.0
    %85 = vmatpush2.xpose.msra.mxu0 0.0
    %86 = vmatprep.subr.mxu0 0.0
    %87 = vmatpush2.xpose.msra.mxu0 0.0
    %88 = vmatprep.subr.mxu0 0.0
    %89 = vmatpush2.xpose.msra.mxu0 0.0
    %90 = vmatprep.subr.mxu0 0.0
    %91 = vmatpush2.xpose.msra.mxu0 0.0
    %92 = vmatprep.mubr.f32.mxu0 0.0
    %93 = vmatmul.mubr.f32.gmra.mxu0 %v23
    %v94 = vpop.f32.mrf.mxu0
    %v95 = vadd.f32 0.0, %v94
    %v96 = vpop.f32.mrf.mxu0
    %97 = vdwg.mxu0
    %v99 = vsel %vm21, %v19, 0
    %101 = vmatprep.subr.mxu0 0.0
    %102 = vmatpush1.xpose.msra.mxu0 0.0
    %103 = vmatprep.subr.mxu0 0.0
    %104 = vmatpush1.xpose.msra.mxu0 0.0
    %105 = vmatprep.subr.mxu0 0.0
    %106 = vmatpush1.xpose.msra.mxu0 0.0
    %107 = vmatprep.subr.mxu0 0.0
    %108 = vmatpush1.xpose.msra.mxu0 0.0
    %109 = vmatprep.subr.mxu0 0.0
    %110 = vmatpush1.xpose.msra.mxu0 0.0
    %111 = vmatprep.subr.mxu0 0.0
    %112 = vmatpush1.xpose.msra.mxu0 0.0
    %113 = vmatprep.subr.mxu0 0.0
    %114 = vmatpush1.xpose.msra.mxu0 0.0
    %115 = vmatprep.subr.mxu0 0.0
    %116 = vmatpush1.xpose.msra.mxu0 0.0
    %117 = vmatprep.subr.mxu0 0.0
    %118 = vmatpush1.xpose.msra.mxu0 0.0
    %119 = vmatprep.subr.mxu0 0.0
    %120 = vmatpush1.xpose.msra.mxu0 0.0
    %121 = vmatprep.subr.mxu0 0.0
    %122 = vmatpush1.xpose.msra.mxu0 0.0
    %123 = vmatprep.subr.mxu0 0.0
    %124 = vmatpush1.xpose.msra.mxu0 0.0
    %125 = vmatprep.subr.mxu0 0.0
    %126 = vmatpush1.xpose.msra.mxu0 0.0
    %127 = vmatprep.subr.mxu0 0.0
    %128 = vmatpush1.xpose.msra.mxu0 0.0
    %129 = vmatprep.subr.mxu0 0.0
    %130 = vmatpush1.xpose.msra.mxu0 0.0
    %131 = vmatprep.subr.mxu0 0.0
    %132 = vmatpush1.xpose.msra.mxu0 %v99
    %133 = vmatprep.subr.mxu0 0.0
    %134 = vmatpush2.xpose.msra.mxu0 0.0
    %135 = vmatprep.subr.mxu0 0.0
    %136 = vmatpush2.xpose.msra.mxu0 0.0
    %137 = vmatprep.subr.mxu0 0.0
    %138 = vmatpush2.xpose.msra.mxu0 0.0
    %139 = vmatprep.subr.mxu0 0.0
    %140 = vmatpush2.xpose.msra.mxu0 0.0
    %141 = vmatprep.subr.mxu0 0.0
    %142 = vmatpush2.xpose.msra.mxu0 0.0
    %143 = vmatprep.subr.mxu0 0.0
    %144 = vmatpush2.xpose.msra.mxu0 0.0
    %145 = vmatprep.subr.mxu0 0.0
    %146 = vmatpush2.xpose.msra.mxu0 0.0
    %147 = vmatprep.subr.mxu0 0.0
    %148 = vmatpush2.xpose.msra.mxu0 0.0
    %149 = vmatprep.subr.mxu0 0.0
    %150 = vmatpush2.xpose.msra.mxu0 0.0
    %151 = vmatprep.subr.mxu0 0.0
    %152 = vmatpush2.xpose.msra.mxu0 0.0
    %153 = vmatprep.subr.mxu0 0.0
    %154 = vmatpush2.xpose.msra.mxu0 0.0
    %155 = vmatprep.subr.mxu0 0.0
    %156 = vmatpush2.xpose.msra.mxu0 0.0
    %157 = vmatprep.subr.mxu0 0.0
    %158 = vmatpush2.xpose.msra.mxu0 0.0
    %159 = vmatprep.subr.mxu0 0.0
    %160 = vmatpush2.xpose.msra.mxu0 0.0
    %161 = vmatprep.subr.mxu0 0.0
    %162 = vmatpush2.xpose.msra.mxu0 0.0
    %163 = vmatprep.subr.mxu0 0.0
    %164 = vmatpush2.xpose.msra.mxu0 0.0
    %165 = vmatprep.mubr.f32.mxu0 0.0
    %166 = vmatmul.mubr.f32.gmra.mxu0 %v23
    %v167 = vpop.f32.mrf.mxu0
    %v168 = vadd.f32 0.0, %v167
    %v169 = vpop.f32.mrf.mxu0
    %170 = vdwg.mxu0
    %vm171 = vcmask 57344
    %v172 = vsel %vm171, %v95, -inf
    %173 = vmax.xlane.f32.xlu0 %v172
    %v174 = vpop.xlane.xlu0 %173
    %v175 = vsel %vm171, %v168, -inf
    %176 = vmax.xlane.f32.xlu0 %v175
    %v177 = vpop.xlane.xlu0 %176
    %v178 = vsub.f32 %v95, %v174
    %v179 = vsub.f32 %v168, %v177
    %v180 = vmul.f32 %v178, 1.442695
    %v181 = vpow.pop %v180
    %v182 = vmul.f32 %v179, 1.442695
    %v183 = vpow.pop %v182
    %v184 = vsel %vm171, %v181, 0.0
    %185 = vadd.xlane.f32.xlu0 %v184
    %v186 = vpop.xlane.xlu0 %185
    %v187 = vsel %vm171, %v183, 0.0
    %188 = vadd.xlane.f32.xlu0 %v187
    %v189 = vpop.xlane.xlu0 %188
    %vm190 = vcmask 1040384
    %v191 = vsel %vm190, %v181, 1.0
    %v192 = vsel %vm190, %v183, 1.0
    %vm193 = vcmask 64512
    %v195 = vsel %vm193, %v191, 0
    %197 = vmatprep.subr.mxu0 0.0
    %198 = vmatpush1.msra.mxu0 0.0
    %199 = vmatprep.subr.mxu0 0.0
    %200 = vmatpush1.msra.mxu0 0.0
    %201 = vmatprep.subr.mxu0 0.0
    %202 = vmatpush1.msra.mxu0 0.0
    %203 = vmatprep.subr.mxu0 0.0
    %204 = vmatpush1.msra.mxu0 0.0
    %205 = vmatprep.subr.mxu0 0.0
    %206 = vmatpush1.msra.mxu0 0.0
    %207 = vmatprep.subr.mxu0 0.0
    %208 = vmatpush1.msra.mxu0 0.0
    %209 = vmatprep.subr.mxu0 0.0
    %210 = vmatpush1.msra.mxu0 0.0
    %211 = vmatprep.subr.mxu0 0.0
    %212 = vmatpush1.msra.mxu0 0.0
    %213 = vmatprep.subr.mxu0 0.0
    %214 = vmatpush1.msra.mxu0 0.0
    %215 = vmatprep.subr.mxu0 0.0
    %216 = vmatpush1.msra.mxu0 0.0
    %217 = vmatprep.subr.mxu0 0.0
    %218 = vmatpush1.msra.mxu0 0.0
    %219 = vmatprep.subr.mxu0 0.0
    %220 = vmatpush1.msra.mxu0 0.0
    %221 = vmatprep.subr.mxu0 0.0
    %222 = vmatpush1.msra.mxu0 0.0
    %223 = vmatprep.subr.mxu0 0.0
    %224 = vmatpush1.msra.mxu0 0.0
    %225 = vmatprep.subr.mxu0 0.0
    %226 = vmatpush1.msra.mxu0 0.0
    %227 = vmatprep.subr.mxu0 0.0
    %228 = vmatpush1.msra.mxu0 %v18
    %229 = vmatprep.subr.mxu0 0.0
    %230 = vmatpush2.msra.mxu0 0.0
    %231 = vmatprep.subr.mxu0 0.0
    %232 = vmatpush2.msra.mxu0 0.0
    %233 = vmatprep.subr.mxu0 0.0
    %234 = vmatpush2.msra.mxu0 0.0
    %235 = vmatprep.subr.mxu0 0.0
    %236 = vmatpush2.msra.mxu0 0.0
    %237 = vmatprep.subr.mxu0 0.0
    %238 = vmatpush2.msra.mxu0 0.0
    %239 = vmatprep.subr.mxu0 0.0
    %240 = vmatpush2.msra.mxu0 0.0
    %241 = vmatprep.subr.mxu0 0.0
    %242 = vmatpush2.msra.mxu0 0.0
    %243 = vmatprep.subr.mxu0 0.0
    %244 = vmatpush2.msra.mxu0 0.0
    %245 = vmatprep.subr.mxu0 0.0
    %246 = vmatpush2.msra.mxu0 0.0
    %247 = vmatprep.subr.mxu0 0.0
    %248 = vmatpush2.msra.mxu0 0.0
    %249 = vmatprep.subr.mxu0 0.0
    %250 = vmatpush2.msra.mxu0 0.0
    %251 = vmatprep.subr.mxu0 0.0
    %252 = vmatpush2.msra.mxu0 0.0
    %253 = vmatprep.subr.mxu0 0.0
    %254 = vmatpush2.msra.mxu0 0.0
    %255 = vmatprep.subr.mxu0 0.0
    %256 = vmatpush2.msra.mxu0 0.0
    %257 = vmatprep.subr.mxu0 0.0
    %258 = vmatpush2.msra.mxu0 0.0
    %259 = vmatprep.subr.mxu0 0.0
    %260 = vmatpush2.msra.mxu0 0.0
    %261 = vmatprep.mubr.f32.mxu0 0.0
    %262 = vmatmul.mubr.f32.gmra.mxu0 %v195
    %v263 = vpop.f32.mrf.mxu0
    %v264 = vadd.f32 0.0, %v263
    %v265 = vpop.f32.mrf.mxu0
    %266 = vdwg.mxu0
    %v268 = vsel %vm193, %v192, 0
    %270 = vmatprep.subr.mxu0 0.0
    %271 = vmatpush1.msra.mxu0 0.0
    %272 = vmatprep.subr.mxu0 0.0
    %273 = vmatpush1.msra.mxu0 0.0
    %274 = vmatprep.subr.mxu0 0.0
    %275 = vmatpush1.msra.mxu0 0.0
    %276 = vmatprep.subr.mxu0 0.0
    %277 = vmatpush1.msra.mxu0 0.0
    %278 = vmatprep.subr.mxu0 0.0
    %279 = vmatpush1.msra.mxu0 0.0
    %280 = vmatprep.subr.mxu0 0.0
    %281 = vmatpush1.msra.mxu0 0.0
    %282 = vmatprep.subr.mxu0 0.0
    %283 = vmatpush1.msra.mxu0 0.0
    %284 = vmatprep.subr.mxu0 0.0
    %285 = vmatpush1.msra.mxu0 0.0
    %286 = vmatprep.subr.mxu0 0.0
    %287 = vmatpush1.msra.mxu0 0.0
    %288 = vmatprep.subr.mxu0 0.0
    %289 = vmatpush1.msra.mxu0 0.0
    %290 = vmatprep.subr.mxu0 0.0
    %291 = vmatpush1.msra.mxu0 0.0
    %292 = vmatprep.subr.mxu0 0.0
    %293 = vmatpush1.msra.mxu0 0.0
    %294 = vmatprep.subr.mxu0 0.0
    %295 = vmatpush1.msra.mxu0 0.0
    %296 = vmatprep.subr.mxu0 0.0
    %297 = vmatpush1.msra.mxu0 0.0
    %298 = vmatprep.subr.mxu0 0.0
    %299 = vmatpush1.msra.mxu0 0.0
    %300 = vmatprep.subr.mxu0 0.0
    %301 = vmatpush1.msra.mxu0 %v19
    %302 = vmatprep.subr.mxu0 0.0
    %303 = vmatpush2.msra.mxu0 0.0
    %304 = vmatprep.subr.mxu0 0.0
    %305 = vmatpush2.msra.mxu0 0.0
    %306 = vmatprep.subr.mxu0 0.0
    %307 = vmatpush2.msra.mxu0 0.0
    %308 = vmatprep.subr.mxu0 0.0
    %309 = vmatpush2.msra.mxu0 0.0
    %310 = vmatprep.subr.mxu0 0.0
    %311 = vmatpush2.msra.mxu0 0.0
    %312 = vmatprep.subr.mxu0 0.0
    %313 = vmatpush2.msra.mxu0 0.0
    %314 = vmatprep.subr.mxu0 0.0
    %315 = vmatpush2.msra.mxu0 0.0
    %316 = vmatprep.subr.mxu0 0.0
    %317 = vmatpush2.msra.mxu0 0.0
    %318 = vmatprep.subr.mxu0 0.0
    %319 = vmatpush2.msra.mxu0 0.0
    %320 = vmatprep.subr.mxu0 0.0
    %321 = vmatpush2.msra.mxu0 0.0
    %322 = vmatprep.subr.mxu0 0.0
    %323 = vmatpush2.msra.mxu0 0.0
    %324 = vmatprep.subr.mxu0 0.0
    %325 = vmatpush2.msra.mxu0 0.0
    %326 = vmatprep.subr.mxu0 0.0
    %327 = vmatpush2.msra.mxu0 0.0
    %328 = vmatprep.subr.mxu0 0.0
    %329 = vmatpush2.msra.mxu0 0.0
    %330 = vmatprep.subr.mxu0 0.0
    %331 = vmatpush2.msra.mxu0 0.0
    %332 = vmatprep.subr.mxu0 0.0
    %333 = vmatpush2.msra.mxu0 0.0
    %334 = vmatprep.mubr.f32.mxu0 0.0
    %335 = vmatmul.mubr.f32.gmra.mxu0 %v268
    %v336 = vpop.f32.mrf.mxu0
    %v337 = vadd.f32 0.0, %v336
    %v338 = vpop.f32.mrf.mxu0
    %339 = vdwg.mxu0
    %v340 = vmul.f32 %v186, 8.0
    %v341 = vmul.f32 %v189, 8.0
    %v342 = vrcp.pop %v340
    %v343 = vrcp.pop %v341
    %v346 = vrot.slane %v264, 1
    %v347 = vrot.slane %v337, 1
    %v350 = vmul.f32 %v264, %v346
    %v351 = vmul.f32 %v337, %v347
    %v352 = vlaneseq
    %v353 = vshrl.u32 %v352, 7
    %v354 = vsub.s32 0, %v353
    %v355 = vrot.slane %v342, %v354
    %v356 = vlaneseq
    %v357 = vshrl.u32 %v356, 7
    %v358 = vsub.s32 0, %v357
    %v359 = vrot.slane %v343, %v358
    %v360 = vmul.f32 %v350, %v355
    %v361 = vmul.f32 %v351, %v359
    %v362 = vld [vmem:[%s2] sm:$0xff]
    %v363 = vld [vmem:[%s2 + $0x8] sm:$0xff]
    %v364 = vld [vmem:[%s2 + $0x10] sm:$0xff]
    %v365 = vld [vmem:[%s2 + $0x18] sm:$0xff]
    %v366 = vld [vmem:[%s3] sm:$0x1]
    %v368 = vlaneseq
    %v369 = vshrl.u32 %v368, 7
    %v370 = vsub.s32 0, %v369
    %v371 = vrot.slane %v366, %v370
    %v375 = vrot.slane %v361, 7
    %vm376 = vcmask 1041409
    %v377 = vsel %vm376, %v375, %v360
    %v378 = vsel %vm21, %v377, 0
    %380 = vmatprep.subr.mxu0 0.0
    %381 = vmatpush1.msra.mxu0 0.0
    %382 = vmatprep.subr.mxu0 0.0
    %383 = vmatpush1.msra.mxu0 0.0
    %384 = vmatprep.subr.mxu0 0.0
    %385 = vmatpush1.msra.mxu0 0.0
    %386 = vmatprep.subr.mxu0 0.0
    %387 = vmatpush1.msra.mxu0 0.0
    %388 = vmatprep.subr.mxu0 0.0
    %389 = vmatpush1.msra.mxu0 0.0
    %390 = vmatprep.subr.mxu0 0.0
    %391 = vmatpush1.msra.mxu0 0.0
    %392 = vmatprep.subr.mxu0 0.0
    %393 = vmatpush1.msra.mxu0 0.0
    %394 = vmatprep.subr.mxu0 0.0
    %395 = vmatpush1.msra.mxu0 0.0
    %396 = vmatprep.subr.mxu0 0.0
    %397 = vmatpush1.msra.mxu0 0.0
    %398 = vmatprep.subr.mxu0 0.0
    %399 = vmatpush1.msra.mxu0 0.0
    %400 = vmatprep.subr.mxu0 0.0
    %401 = vmatpush1.msra.mxu0 0.0
    %402 = vmatprep.subr.mxu0 0.0
    %403 = vmatpush1.msra.mxu0 0.0
    %404 = vmatprep.subr.mxu0 0.0
    %405 = vmatpush1.msra.mxu0 %v365
    %406 = vmatprep.subr.mxu0 0.0
    %407 = vmatpush1.msra.mxu0 %v364
    %408 = vmatprep.subr.mxu0 0.0
    %409 = vmatpush1.msra.mxu0 %v363
    %410 = vmatprep.subr.mxu0 0.0
    %411 = vmatpush1.msra.mxu0 %v362
    %412 = vmatprep.subr.mxu0 0.0
    %413 = vmatpush2.msra.mxu0 0.0
    %414 = vmatprep.subr.mxu0 0.0
    %415 = vmatpush2.msra.mxu0 0.0
    %416 = vmatprep.subr.mxu0 0.0
    %417 = vmatpush2.msra.mxu0 0.0
    %418 = vmatprep.subr.mxu0 0.0
    %419 = vmatpush2.msra.mxu0 0.0
    %420 = vmatprep.subr.mxu0 0.0
    %421 = vmatpush2.msra.mxu0 0.0
    %422 = vmatprep.subr.mxu0 0.0
    %423 = vmatpush2.msra.mxu0 0.0
    %424 = vmatprep.subr.mxu0 0.0
    %425 = vmatpush2.msra.mxu0 0.0
    %426 = vmatprep.subr.mxu0 0.0
    %427 = vmatpush2.msra.mxu0 0.0
    %428 = vmatprep.subr.mxu0 0.0
    %429 = vmatpush2.msra.mxu0 0.0
    %430 = vmatprep.subr.mxu0 0.0
    %431 = vmatpush2.msra.mxu0 0.0
    %432 = vmatprep.subr.mxu0 0.0
    %433 = vmatpush2.msra.mxu0 0.0
    %434 = vmatprep.subr.mxu0 0.0
    %435 = vmatpush2.msra.mxu0 0.0
    %436 = vmatprep.subr.mxu0 0.0
    %437 = vmatpush2.msra.mxu0 0.0
    %438 = vmatprep.subr.mxu0 0.0
    %439 = vmatpush2.msra.mxu0 0.0
    %440 = vmatprep.subr.mxu0 0.0
    %441 = vmatpush2.msra.mxu0 0.0
    %442 = vmatprep.subr.mxu0 0.0
    %443 = vmatpush2.msra.mxu0 0.0
    %444 = vmatprep.mubr.f32.mxu0 0.0
    %445 = vmatmul.mubr.f32.gmra.mxu0 %v378
    %v446 = vpop.f32.mrf.mxu0
    %v447 = vadd.f32 %v371, %v446
    %v448 = vpop.f32.mrf.mxu0
    %449 = vdwg.mxu0
    %450 = vst [vmem:[#allocation2] sm:$0x3] %v447
    // Predicated region
    $region18: #{global_inter_modal_attention.1} parent=1 // pred_check
      _
    $region19: #{global_inter_modal_attention.1} parent=1 // pred_check_branch
      %452 = sbr.rel (0) target = $region21
    $region20: #{global_inter_modal_attention.1} parent=1 // pred_region
      %s454 = ssub.s32 32, 32
      %455 = vsyncadd [#allocation3], %s454
      %s457 = sshll.u32 [#allocation2], 4
      %s458 = int_to_ptr.vmem [resolvable:$true] %s457
      %460 = dma.vmem_to_hbm [thread:$0]  %s458, 32, %s4, [#allocation3]
    $region21: #{global_inter_modal_attention.1} parent=1 // pred_fallthru
      _
    // Predicated region
    $region22: #{global_inter_modal_attention.1} parent=1 // pred_check
      _
    $region23: #{global_inter_modal_attention.1} parent=1 // pred_check_branch
      %462 = sbr.rel (0) target = $region25
    $region24: #{global_inter_modal_attention.1} parent=1 // pred_region
      %463 = dma.done [#allocation3], 32
    $region25: #{global_inter_modal_attention.1} parent=1 // pred_fallthru
      _
    %464 = vsyncpa [#allocation3], 1

</llo_original>
